<compile_context>
chip_gen: v5e
topology: v5e:2x2
jax: 0.10.0
libtpu: 0.0.40
codegen_flags: <defaults>
</compile_context>

<pallas_src>
import functools

import jax
import jax.numpy as jnp
from jax.experimental import pallas as pl
from jax.experimental.pallas import tpu as pltpu

EPS = 1e-5
NEG_SLOPE = 0.2

TN = 128   # output-feature tile (lane-dense: multiple of 128)
TK = 128   # contraction tile


def _linear_block_kernel(x_ref, w_ref, gamma_ref, beta_ref, o_ref, acc_ref):
    k = pl.program_id(1)

    @pl.when(k == 0)
    def _():
        acc_ref[...] = jnp.zeros_like(acc_ref)

    # Linear (bias-free; BN cancels it): accumulate x @ W in f32 on the MXU.
    acc_ref[...] += jnp.dot(
        x_ref[...], w_ref[...], preferred_element_type=jnp.float32
    )

    @pl.when(k == pl.num_programs(1) - 1)
    def _():
        y = acc_ref[...]                                   # (N, TN) f32
        n = y.shape[0]
        inv_n = 1.0 / n
        mean = jnp.sum(y, axis=0, keepdims=True) * inv_n   # (1, TN)
        centered = y - mean
        var = jnp.sum(centered * centered, axis=0, keepdims=True) * inv_n
        # Fold gamma into the rsqrt: one (1,TN) row op instead of a (N,TN) multiply.
        scale = gamma_ref[...] * jax.lax.rsqrt(var + EPS)
        z = centered * scale + beta_ref[...]
        # LeakyReLU(0.2)
        o_ref[...] = jnp.where(z >= 0, z, NEG_SLOPE * z).astype(o_ref.dtype)


def _pad_to(a, axis, multiple, value=0.0):
    size = a.shape[axis]
    pad = (-size) % multiple
    if pad == 0:
        return a
    widths = [(0, 0)] * a.ndim
    widths[axis] = (0, pad)
    return jnp.pad(a, widths, constant_values=value)


@functools.partial(jax.jit, static_argnames=())
def linear_block(x, w, gamma, beta):
    """LinearBlock forward (Batch norm, training stats, LeakyReLU 0.2).

    x:     (N, in_dim)  float32
    w:     (in_dim, out_dim)  float32  (pre-transposed Linear weight)
    gamma: (1, out_dim) float32  (BN weight)
    beta:  (1, out_dim) float32  (BN bias)
    returns (N, out_dim) float32
    """
    n, in_dim = x.shape
    out_dim = w.shape[1]

    # Pad contraction and feature dims to tile multiples (lane-dense output).
    x_p = _pad_to(x, 1, TK)
    w_p = _pad_to(_pad_to(w, 0, TK), 1, TN)
    gamma_p = _pad_to(gamma, 1, TN, value=1.0)
    beta_p = _pad_to(beta, 1, TN, value=0.0)

    in_pad = x_p.shape[1]
    out_pad = w_p.shape[1]

    # bf16 MXU operands, f32 accumulation.
    x_bf = x_p.astype(jnp.bfloat16)
    w_bf = w_p.astype(jnp.bfloat16)

    grid = (out_pad // TN, in_pad // TK)

    out = pl.pallas_call(
        _linear_block_kernel,
        out_shape=jax.ShapeDtypeStruct((n, out_pad), jnp.float32),
        grid=grid,
        in_specs=[
            pl.BlockSpec((n, TK), lambda j, k: (0, k)),     # x tile
            pl.BlockSpec((TK, TN), lambda j, k: (k, j)),    # w tile
            pl.BlockSpec((1, TN), lambda j, k: (0, j)),     # gamma
            pl.BlockSpec((1, TN), lambda j, k: (0, j)),     # beta
        ],
        out_specs=pl.BlockSpec((n, TN), lambda j, k: (0, j)),
        scratch_shapes=[pltpu.VMEM((n, TN), jnp.float32)],
        compiler_params=pltpu.CompilerParams(
            dimension_semantics=("parallel", "arbitrary"),
        ),
    )(x_bf, w_bf, gamma_p, beta_p)

    # Slice off padded feature columns (never feed them downstream).
    return out[:, :out_dim]


def reference(x, w, b, gamma, beta):
    """PyTorch-equivalent f32 reference (Linear + bias, BN training, LeakyReLU)."""
    y = x @ w + b
    mean = y.mean(axis=0, keepdims=True)
    var = ((y - mean) ** 2).mean(axis=0, keepdims=True)
    z = (y - mean) / jnp.sqrt(var + EPS) * gamma + beta
    return jnp.where(z >= 0, z, NEG_SLOPE * z)


if __name__ == "__main__":
    key = jax.random.PRNGKey(0)
    N, IN_DIM, OUT_DIM = 64, 256, 192   # OUT_DIM=192 exercises padding to 256

    kx, kw, kb = jax.random.split(key, 3)
    x = jax.random.normal(kx, (N, IN_DIM), dtype=jnp.float32)

    # PyTorch-style uniform init for Linear; BN gamma=1, beta=0.
    bound = 1.0 / (IN_DIM ** 0.5)
    w = jax.random.uniform(kw, (IN_DIM, OUT_DIM), jnp.float32, -bound, bound)
    b = jax.random.uniform(kb, (1, OUT_DIM), jnp.float32, -bound, bound)
    gamma = jnp.ones((1, OUT_DIM), jnp.float32)
    beta = jnp.zeros((1, OUT_DIM), jnp.float32)

    out = linear_block(x, w, gamma, beta)   # bias dropped: BN cancels it exactly
    out = jax.block_until_ready(out)

    ref = reference(x, w, b, gamma, beta)
    assert out.shape == (N, OUT_DIM), out.shape
    assert bool(jnp.all(jnp.isfinite(out))), "non-finite output"
    # bf16 MXU operands vs f32 reference -> loose tolerance on normalized outputs.
    assert jnp.allclose(out, ref, atol=3e-2, rtol=3e-2), (
        f"mismatch vs reference, max err={float(jnp.max(jnp.abs(out - ref)))}"
    )

    print("KERNEL_OK")
</pallas_src>

<mosaic_0001>
module attributes {stable_mosaic.version = 11 : i64} {
  func.func @_linear_block_kernel(%arg0: i32, %arg1: i32, %arg2: memref<64x128xbf16, #tpu.memory_space<vmem>>, %arg3: memref<128x128xbf16, #tpu.memory_space<vmem>>, %arg4: memref<1x128xf32, #tpu.memory_space<vmem>>, %arg5: memref<1x128xf32, #tpu.memory_space<vmem>>, %arg6: memref<64x128xf32, #tpu.memory_space<vmem>>, %arg7: memref<64x128xf32, #tpu.memory_space<vmem>>) attributes {dimension_semantics = [#tpu.dimension_semantics<parallel>, #tpu.dimension_semantics<arbitrary>], iteration_bounds = array<i64: 2, 2>, scalar_prefetch = 0 : i64, scratch_operands = 1 : i64, tpu.core_type = #tpu.core_type<tc>, window_params = [{transform_indices = @transform_0, window_bounds = array<i64: 64, 128>}, {transform_indices = @transform_1, window_bounds = array<i64: 128, 128>}, {transform_indices = @transform_2, window_bounds = array<i64: 1, 128>}, {transform_indices = @transform_3, window_bounds = array<i64: 1, 128>}, {transform_indices = @transform_4, window_bounds = array<i64: 64, 128>}]} {
    %c0_i32 = arith.constant 0 : i32
    %0 = arith.cmpi eq, %arg1, %c0_i32 : i32
    %1 = arith.extui %0 : i1 to i32
    %c0_i32_0 = arith.constant 0 : i32
    %2 = arith.cmpi ne, %1, %c0_i32_0 : i32
    scf.if %2 {
      %cst_9 = arith.constant 0.000000e+00 : f32
      %12 = vector.broadcast %cst_9 : f32 to vector<64x128xf32>
      %c0_10 = arith.constant 0 : index
      %c0_11 = arith.constant 0 : index
      %13 = vector.load %arg7[%c0_10, %c0_11] : memref<64x128xf32, #tpu.memory_space<vmem>>, vector<64x128xf32>
      tpu.vector_store %arg7[%c0_10, %c0_11], %12 {strides = array<i32>} : memref<64x128xf32, #tpu.memory_space<vmem>>, vector<64x128xf32>,
    } else {
    }
    %c0 = arith.constant 0 : index
    %c0_1 = arith.constant 0 : index
    %3 = vector.load %arg7[%c0, %c0_1] : memref<64x128xf32, #tpu.memory_space<vmem>>, vector<64x128xf32>
    %c0_2 = arith.constant 0 : index
    %c0_3 = arith.constant 0 : index
    %4 = vector.load %arg2[%c0_2, %c0_3] : memref<64x128xbf16, #tpu.memory_space<vmem>>, vector<64x128xbf16>
    %c0_4 = arith.constant 0 : index
    %c0_5 = arith.constant 0 : index
    %5 = vector.load %arg3[%c0_4, %c0_5] : memref<128x128xbf16, #tpu.memory_space<vmem>>, vector<128x128xbf16>
    %cst = arith.constant dense<0.000000e+00> : vector<64x128xf32>
    %6 = tpu.matmul %4, %5, %cst {dimension_numbers = #tpu.dot_dimension_numbers<[1], [0], [0], [1], [0, 0, 1, 1], [], []>} : vector<64x128xbf16>, vector<128x128xbf16>, vector<64x128xf32> -> vector<64x128xf32>
    %7 = arith.addf %3, %6 : vector<64x128xf32>
    %c0_6 = arith.constant 0 : index
    %c0_7 = arith.constant 0 : index
    %8 = vector.load %arg7[%c0_6, %c0_7] : memref<64x128xf32, #tpu.memory_space<vmem>>, vector<64x128xf32>
    tpu.vector_store %arg7[%c0_6, %c0_7], %7 {strides = array<i32>} : memref<64x128xf32, #tpu.memory_space<vmem>>, vector<64x128xf32>,
    %c1_i32 = arith.constant 1 : i32
    %9 = arith.cmpi eq, %arg1, %c1_i32 : i32
    %10 = arith.extui %9 : i1 to i32
    %c0_i32_8 = arith.constant 0 : i32
    %11 = arith.cmpi ne, %10, %c0_i32_8 : i32
    scf.if %11 {
      %c0_9 = arith.constant 0 : index
      %c0_10 = arith.constant 0 : index
      %12 = vector.load %arg7[%c0_9, %c0_10] : memref<64x128xf32, #tpu.memory_space<vmem>>, vector<64x128xf32>
      %cst_11 = arith.constant dense<0.000000e+00> : vector<128xf32>
      %13 = vector.multi_reduction <add>, %12, %cst_11 [0] : vector<64x128xf32> to vector<128xf32>
      %14 = vector.shape_cast %13 : vector<128xf32> to vector<1x128xf32>
      %cst_12 = arith.constant 1.562500e-02 : f32
      %15 = vector.broadcast %cst_12 : f32 to vector<1x128xf32>
      %16 = arith.mulf %14, %15 : vector<1x128xf32>
      %17 = vector.broadcast %16 : vector<1x128xf32> to vector<64x128xf32>
      %18 = arith.subf %12, %17 : vector<64x128xf32>
      %19 = arith.mulf %18, %18 : vector<64x128xf32>
      %cst_13 = arith.constant dense<0.000000e+00> : vector<128xf32>
      %20 = vector.multi_reduction <add>, %19, %cst_13 [0] : vector<64x128xf32> to vector<128xf32>
      %21 = vector.shape_cast %20 : vector<128xf32> to vector<1x128xf32>
      %cst_14 = arith.constant 1.562500e-02 : f32
      %22 = vector.broadcast %cst_14 : f32 to vector<1x128xf32>
      %23 = arith.mulf %21, %22 : vector<1x128xf32>
      %c0_15 = arith.constant 0 : index
      %c0_16 = arith.constant 0 : index
      %24 = vector.load %arg4[%c0_15, %c0_16] : memref<1x128xf32, #tpu.memory_space<vmem>>, vector<1x128xf32>
      %cst_17 = arith.constant 9.99999974E-6 : f32
      %25 = vector.broadcast %cst_17 : f32 to vector<1x128xf32>
      %26 = arith.addf %23, %25 : vector<1x128xf32>
      %27 = math.rsqrt %26 : vector<1x128xf32>
      %28 = arith.mulf %24, %27 : vector<1x128xf32>
      %29 = vector.broadcast %28 : vector<1x128xf32> to vector<64x128xf32>
      %30 = arith.mulf %18, %29 : vector<64x128xf32>
      %c0_18 = arith.constant 0 : index
      %c0_19 = arith.constant 0 : index
      %31 = vector.load %arg5[%c0_18, %c0_19] : memref<1x128xf32, #tpu.memory_space<vmem>>, vector<1x128xf32>
      %32 = vector.broadcast %31 : vector<1x128xf32> to vector<64x128xf32>
      %33 = arith.addf %30, %32 : vector<64x128xf32>
      %cst_20 = arith.constant 0.000000e+00 : f32
      %34 = vector.broadcast %cst_20 : f32 to vector<64x128xf32>
      %35 = arith.cmpf oge, %33, %34 : vector<64x128xf32>
      %cst_21 = arith.constant 2.000000e-01 : f32
      %36 = vector.broadcast %cst_21 : f32 to vector<64x128xf32>
      %37 = arith.mulf %36, %33 : vector<64x128xf32>
      %38 = arith.select %35, %33, %37 : vector<64x128xi1>, vector<64x128xf32>
      %c0_22 = arith.constant 0 : index
      %c0_23 = arith.constant 0 : index
      %39 = vector.load %arg6[%c0_22, %c0_23] : memref<64x128xf32, #tpu.memory_space<vmem>>, vector<64x128xf32>
      tpu.vector_store %arg6[%c0_22, %c0_23], %38 {strides = array<i32>} : memref<64x128xf32, #tpu.memory_space<vmem>>, vector<64x128xf32>,
    } else {
    }
    return
  }
  func.func @transform_0(%arg0: i32, %arg1: i32) -> (i32, i32) {
    %c0_i32 = arith.constant 0 : i32
    %c0_i32_0 = arith.constant 0 : i32
    return %c0_i32, %arg1 : i32, i32
  }
  func.func @transform_1(%arg0: i32, %arg1: i32) -> (i32, i32) {
    %c0_i32 = arith.constant 0 : i32
    return %arg1, %arg0 : i32, i32
  }
  func.func @transform_2(%arg0: i32, %arg1: i32) -> (i32, i32) {
    %c0_i32 = arith.constant 0 : i32
    %c0_i32_0 = arith.constant 0 : i32
    return %c0_i32, %arg0 : i32, i32
  }
  func.func @transform_3(%arg0: i32, %arg1: i32) -> (i32, i32) {
    %c0_i32 = arith.constant 0 : i32
    %c0_i32_0 = arith.constant 0 : i32
    return %c0_i32, %arg0 : i32, i32
  }
  func.func @transform_4(%arg0: i32, %arg1: i32) -> (i32, i32) {
    %c0_i32 = arith.constant 0 : i32
    %c0_i32_0 = arith.constant 0 : i32
    return %c0_i32, %arg0 : i32, i32
  }
}

</mosaic_0001>

<llo_original>
// kernel: linear_block.1
$region0: #{linear_block.1}
  #allocation0 [shape = 'u32[]', space=smem, size = 0x4, offset = 0x4, fixed_abs, tag = 'smem constant byte address 0x4 - core index']
  #allocation1 [shape = 'u32[72,128]{1,0:T(1,128)}', space=vmem, size = 0x9000, scoped, tag = 'internal scratch']
  #allocation2 [shape = 'f32[64,128]{1,0:T(8,128)}', space=vmem, size = 0x8000, scoped, tag = 'scratch operand']
  %s0 = inlined_call_operand.vmem [shape: bf16[64,256], index: 0, kind: input, shape index: {}]
  %s1 = inlined_call_operand.vmem [shape: bf16[256,256], index: 1, kind: input, shape index: {}]
  %s2 = inlined_call_operand.vmem [shape: f32[1,256], index: 2, kind: input, shape index: {}]
  %s3 = inlined_call_operand.vmem [shape: f32[1,256], index: 3, kind: input, shape index: {}]
  %s4 = inlined_call_operand.hbm [shape: f32[64,256], index: 4, kind: output, shape index: {}]
  %s5 = sld [smem:[#allocation0]]
  $region139: #{linear_block.1} parent=0
    _
  %s7 = ssub.s32 1, %s5
  %s8 = scalar_select 0, %s7, %s5
  $region1: #{linear_block.1} parent=0
    #allocation3 [shape = 'u8[32768]{0}', space=vmem, size = 0x8000, scoped, tag = 'input window, operand 0']
    #allocation4 [shape = 'u8[65536]{0}', space=vmem, size = 0x10000, scoped, tag = 'input window, operand 1']
    #allocation5 [shape = 'u8[65536]{0}', space=vmem, size = 0x10000, scoped, tag = 'output window, operand 0']
    #allocation6 [shape = 's32[2]{0}', space=sflag, size = 0x8, scoped, tag = 'scoped memory for linear_block.1']
    %9 = vsyncpa [#allocation6], 0
    %s10 = scalar_lea.sflag [#allocation6], 1
    %11 = vsyncpa %s10, 0
    loop: start=0, step=1, limit=6
    $region2: #{linear_block.1} parent=1 // loop_pre_header
      _
    $region3: #{linear_block.1} parent=1 // loop_header
      %s13 = sphi 0, %s17
      %p14 = scmp.ge.s32.totalorder %s13, 6
      %s20 = sphi 0, %s32
      %s21 = sphi 0, %s28
      %s22 = sphi 0, %s20
      %s23 = sphi 0, %s21
      %s24 = sphi 0, %s22
      %s25 = sphi 0, %s23
      %s35 = sphi 0, %s37
      %s38 = sphi 0, %s35
      %s39 = sphi 0, %s38
      %s55 = sphi 0, %s39
      %s63 = sphi 0, %s65
      %s66 = sphi 0, %s63
      %s67 = sphi 0, %s66
      %s83 = sphi 0, %s67
      %s89 = sphi 0, %s91
      %s92 = sphi 0, %s89
      %s93 = sphi 0, %s92
      %s109 = sphi 0, %s93
      %s115 = sphi 0, %s117
      %s118 = sphi 0, %s115
      %s119 = sphi 0, %s118
      %s135 = sphi 0, %s119
      %s141 = sphi 0, %s143
      %s144 = sphi 0, %s141
      %s145 = sphi 0, %s144
      %s161 = sphi 0, %s145
    $region4: #{linear_block.1} parent=1 // loop_header_branch
      %16 = sbr.rel (%p14) target = $region8
    $region5: #{linear_block.1} parent=1 // loop_body
      %s18 = ssub.s32 %s13, 1
      %s19 = ssub.s32 %s13, 2
      %s26 = sadd.s32 1, %s21
      %p27 = scmp.ge.s32.totalorder %s26, 2
      %s28 = scalar_select %p27, 0, %s26
      %s29 = sadd.s32 1, %s20
      %s30 = scalar_select %p27, %s29, %s20
      %p31 = scmp.ge.s32.totalorder %s30, 2
      %s32 = scalar_select %p31, 0, %s30
      %s33 = ssub.s32 %s21, %s28
      %p34 = scmp.eq.s32.totalorder %s33, 0
      %s36 = sadd.s32 %s35, 1
      %s37 = scalar_select %p34, %s35, %s36
      %p40 = pneg %p34
      %p41 = scmp.eq.s32.totalorder %s13, 3
      %p42 = por %p40, %p41
      %p43 = scmp.ne.s32.totalorder %s35, %s38
      %p44 = scmp.eq.s32.totalorder %s13, 0
      %p45 = por %p43, %p44
      %p46 = scmp.ne.s32.totalorder %s35, %s38
      %p47 = scmp.eq.s32.totalorder %s18, 3
      %p48 = por %p46, %p47
      %p49 = scmp.ne.s32.totalorder %s38, %s39
      %p50 = scmp.eq.s32.totalorder %s18, 0
      %p51 = por %p49, %p50
      %p52 = scmp.ne.s32.totalorder %s38, %s39
      %p53 = scmp.eq.s32.totalorder %s19, 3
      %p54 = por %p52, %p53
      %p56 = scmp.ne.s32.totalorder %s39, %s55
      %p57 = scmp.eq.s32.totalorder %s19, 0
      %p58 = por %p56, %p57
      %s59 = ssub.s32 %s21, %s28
      %s60 = ssub.s32 %s20, %s32
      %s61 = sor.u32 %s59, %s60
      %p62 = scmp.eq.s32.totalorder %s61, 0
      %s64 = sadd.s32 %s63, 1
      %s65 = scalar_select %p62, %s63, %s64
      %p68 = pneg %p62
      %p69 = scmp.eq.s32.totalorder %s13, 3
      %p70 = por %p68, %p69
      %p71 = scmp.ne.s32.totalorder %s63, %s66
      %p72 = scmp.eq.s32.totalorder %s13, 0
      %p73 = por %p71, %p72
      %p74 = scmp.ne.s32.totalorder %s63, %s66
      %p75 = scmp.eq.s32.totalorder %s18, 3
      %p76 = por %p74, %p75
      %p77 = scmp.ne.s32.totalorder %s66, %s67
      %p78 = scmp.eq.s32.totalorder %s18, 0
      %p79 = por %p77, %p78
      %p80 = scmp.ne.s32.totalorder %s66, %s67
      %p81 = scmp.eq.s32.totalorder %s19, 3
      %p82 = por %p80, %p81
      %p84 = scmp.ne.s32.totalorder %s67, %s83
      %p85 = scmp.eq.s32.totalorder %s19, 0
      %p86 = por %p84, %p85
      %s87 = ssub.s32 %s20, %s32
      %p88 = scmp.eq.s32.totalorder %s87, 0
      %s90 = sadd.s32 %s89, 1
      %s91 = scalar_select %p88, %s89, %s90
      %p94 = pneg %p88
      %p95 = scmp.eq.s32.totalorder %s13, 3
      %p96 = por %p94, %p95
      %p97 = scmp.ne.s32.totalorder %s89, %s92
      %p98 = scmp.eq.s32.totalorder %s13, 0
      %p99 = por %p97, %p98
      %p100 = scmp.ne.s32.totalorder %s89, %s92
      %p101 = scmp.eq.s32.totalorder %s18, 3
      %p102 = por %p100, %p101
      %p103 = scmp.ne.s32.totalorder %s92, %s93
      %p104 = scmp.eq.s32.totalorder %s18, 0
      %p105 = por %p103, %p104
      %p106 = scmp.ne.s32.totalorder %s92, %s93
      %p107 = scmp.eq.s32.totalorder %s19, 3
      %p108 = por %p106, %p107
      %p110 = scmp.ne.s32.totalorder %s93, %s109
      %p111 = scmp.eq.s32.totalorder %s19, 0
      %p112 = por %p110, %p111
      %s113 = ssub.s32 %s20, %s32
      %p114 = scmp.eq.s32.totalorder %s113, 0
      %s116 = sadd.s32 %s115, 1
      %s117 = scalar_select %p114, %s115, %s116
      %p120 = pneg %p114
      %p121 = scmp.eq.s32.totalorder %s13, 3
      %p122 = por %p120, %p121
      %p123 = scmp.ne.s32.totalorder %s115, %s118
      %p124 = scmp.eq.s32.totalorder %s13, 0
      %p125 = por %p123, %p124
      %p126 = scmp.ne.s32.totalorder %s115, %s118
      %p127 = scmp.eq.s32.totalorder %s18, 3
      %p128 = por %p126, %p127
      %p129 = scmp.ne.s32.totalorder %s118, %s119
      %p130 = scmp.eq.s32.totalorder %s18, 0
      %p131 = por %p129, %p130
      %p132 = scmp.ne.s32.totalorder %s118, %s119
      %p133 = scmp.eq.s32.totalorder %s19, 3
      %p134 = por %p132, %p133
      %p136 = scmp.ne.s32.totalorder %s119, %s135
      %p137 = scmp.eq.s32.totalorder %s19, 0
      %p138 = por %p136, %p137
      %s139 = ssub.s32 %s20, %s32
      %p140 = scmp.eq.s32.totalorder %s139, 0
      %s142 = sadd.s32 %s141, 1
      %s143 = scalar_select %p140, %s141, %s142
      %p146 = pneg %p140
      %p147 = scmp.eq.s32.totalorder %s13, 3
      %p148 = por %p146, %p147
      %p149 = scmp.ne.s32.totalorder %s141, %s144
      %p150 = scmp.eq.s32.totalorder %s13, 0
      %p151 = por %p149, %p150
      %p152 = scmp.ne.s32.totalorder %s141, %s144
      %p153 = scmp.eq.s32.totalorder %s18, 3
      %p154 = por %p152, %p153
      %p155 = scmp.ne.s32.totalorder %s144, %s145
      %p156 = scmp.eq.s32.totalorder %s18, 0
      %p157 = por %p155, %p156
      %p158 = scmp.ne.s32.totalorder %s144, %s145
      %p159 = scmp.eq.s32.totalorder %s19, 3
      %p160 = por %p158, %p159
      %p162 = scmp.ne.s32.totalorder %s145, %s161
      %p163 = scmp.eq.s32.totalorder %s19, 0
      %p164 = por %p162, %p163
      %p165 = scmp.le.s32.totalorder 1, %s13
      %p166 = scmp.lt.s32.totalorder %s13, 5
      %p167 = pnand %p165, %p166
      %p168 = pneg %p167
      // Predicated region
      $region9: #{linear_block.1} parent=5 // pred_check
        _
      $region10: #{linear_block.1} parent=5 // pred_check_branch
        %170 = sbr.rel (%p167) target = $region12
      $region11: #{linear_block.1} parent=5 // pred_region
        %s171 = ssub.s32 %s13, 1
      $region12: #{linear_block.1} parent=5 // pred_fallthru
        _
      %p172 = scmp.lt.s32.totalorder %s13, 4
      // Predicated region
      $region13: #{linear_block.1} parent=5 // pred_check
        %p173 = pneg %p172
      $region14: #{linear_block.1} parent=5 // pred_check_branch
        %175 = sbr.rel (%p173) target = $region16
      $region15: #{linear_block.1} parent=5 // pred_region
        // Predicated region
        $region17: #{linear_block.1} parent=15 // pred_check
          %p176 = pneg %p45
        $region18: #{linear_block.1} parent=15 // pred_check_branch
          %178 = sbr.rel (%p176) target = $region20
        $region19: #{linear_block.1} parent=15 // pred_region
          %s179 = sand.u32 %s35, 1
          %s180 = sand.u32 %s35, 1
          %s181 = smul.addr %s180, 32
          %s182 = scalar_lea.vmem [#allocation3], %s181
          %s183 = smul.addr %s21, 4
          %s184 = scalar_lea.vmem %s0, %s183
          // Predicated region
          $region21: #{linear_block.1} parent=19 // pred_check
            _
          $region22: #{linear_block.1} parent=19 // pred_check_branch
            %186 = sbr.rel (0) target = $region24
          $region23: #{linear_block.1} parent=19 // pred_region
            // Predicated region
            $region25: #{linear_block.1} parent=23 // pred_check
              _
            $region26: #{linear_block.1} parent=23 // pred_check_branch
              %188 = sbr.rel target = $region28
            $region27: #{linear_block.1} parent=23 // pred_region
              // Predicated region
              $region40: #{linear_block.1} parent=27 // pred_check
                _
              $region41: #{linear_block.1} parent=27 // pred_check_branch
                %218 = sbr.rel (0) target = $region43
              $region42: #{linear_block.1} parent=27 // pred_region
                loop: start=0, step=1, limit=1
                $region44: #{linear_block.1} parent=42 // loop_pre_header
                  _
                $region45: #{linear_block.1} parent=42 // loop_header
                  %s220 = sphi 0, %s224
                  %p221 = scmp.ge.s32.totalorder %s220, 1
                  %s225 = sphi %s184, %s184
                  %s226 = sphi %s182, %s182
                $region46: #{linear_block.1} parent=42 // loop_header_branch
                  %223 = sbr.rel (%p221) target = $region50
                $region47: #{linear_block.1} parent=42 // loop_body
                  _
                $region48: #{linear_block.1} parent=42 // loop_footer
                  %s224 = sadd.s32 1, %s220
                $region49: #{linear_block.1} parent=42 // loop_footer_branch
                  %219 = sbr.rel target = $region45
                $region50: #{linear_block.1} parent=42 // loop_exit
                  _
                %s228 = ssub.s32 16, 1
                loop: start=0, step=1, limit=1
                $region51: #{linear_block.1} parent=42 // loop_pre_header
                  _
                $region52: #{linear_block.1} parent=42 // loop_header
                  %s230 = sphi 0, %s234
                  %p231 = scmp.ge.s32.totalorder %s230, 1
                  %s235 = sphi %s184, %s184
                  %s236 = sphi %s182, %s182
                $region53: #{linear_block.1} parent=42 // loop_header_branch
                  %233 = sbr.rel (%p231) target = $region57
                $region54: #{linear_block.1} parent=42 // loop_body
                  %v237 = vld [vmem:[%s235] sm:%s228]
                  %238 = vst [vmem:[%s236] sm:%s228] %v237
                  %v239 = vld [vmem:[%s235 + $0x8] sm:%s228]
                  %240 = vst [vmem:[%s236 + $0x4] sm:%s228] %v239
                  %v241 = vld [vmem:[%s235 + $0x10] sm:%s228]
                  %242 = vst [vmem:[%s236 + $0x8] sm:%s228] %v241
                  %v243 = vld [vmem:[%s235 + $0x18] sm:%s228]
                  %244 = vst [vmem:[%s236 + $0xc] sm:%s228] %v243
                  %v245 = vld [vmem:[%s235 + $0x20] sm:%s228]
                  %246 = vst [vmem:[%s236 + $0x10] sm:%s228] %v245
                  %v247 = vld [vmem:[%s235 + $0x28] sm:%s228]
                  %248 = vst [vmem:[%s236 + $0x14] sm:%s228] %v247
                  %v249 = vld [vmem:[%s235 + $0x30] sm:%s228]
                  %250 = vst [vmem:[%s236 + $0x18] sm:%s228] %v249
                  %v251 = vld [vmem:[%s235 + $0x38] sm:%s228]
                  %252 = vst [vmem:[%s236 + $0x1c] sm:%s228] %v251
                $region55: #{linear_block.1} parent=42 // loop_footer
                  %s234 = sadd.s32 1, %s230
                $region56: #{linear_block.1} parent=42 // loop_footer_branch
                  %229 = sbr.rel target = $region52
                $region57: #{linear_block.1} parent=42 // loop_exit
                  _
              $region43: #{linear_block.1} parent=27 // pred_fallthru
                _
            $region28: #{linear_block.1} parent=23 // pred_fallthru
              _
            // Predicated region
            $region29: #{linear_block.1} parent=23 // pred_check
              _
            $region30: #{linear_block.1} parent=23 // pred_check_branch
              %190 = sbr.rel (0) target = $region32
            $region31: #{linear_block.1} parent=23 // pred_region
              %s192 = ssub.s32 16, 1
              loop: start=0, step=1, limit=1
              $region33: #{linear_block.1} parent=31 // loop_pre_header
                _
              $region34: #{linear_block.1} parent=31 // loop_header
                %s194 = sphi 0, %s198
                %p195 = scmp.ge.s32.totalorder %s194, 1
                %s199 = sphi %s184, %s184
                %s200 = sphi %s182, %s182
              $region35: #{linear_block.1} parent=31 // loop_header_branch
                %197 = sbr.rel (%p195) target = $region39
              $region36: #{linear_block.1} parent=31 // loop_body
                %v201 = vld [vmem:[%s199] sm:%s192]
                %202 = vst [vmem:[%s200] sm:%s192] %v201
                %v203 = vld [vmem:[%s199 + $0x8] sm:%s192]
                %204 = vst [vmem:[%s200 + $0x4] sm:%s192] %v203
                %v205 = vld [vmem:[%s199 + $0x10] sm:%s192]
                %206 = vst [vmem:[%s200 + $0x8] sm:%s192] %v205
                %v207 = vld [vmem:[%s199 + $0x18] sm:%s192]
                %208 = vst [vmem:[%s200 + $0xc] sm:%s192] %v207
                %v209 = vld [vmem:[%s199 + $0x20] sm:%s192]
                %210 = vst [vmem:[%s200 + $0x10] sm:%s192] %v209
                %v211 = vld [vmem:[%s199 + $0x28] sm:%s192]
                %212 = vst [vmem:[%s200 + $0x14] sm:%s192] %v211
                %v213 = vld [vmem:[%s199 + $0x30] sm:%s192]
                %214 = vst [vmem:[%s200 + $0x18] sm:%s192] %v213
                %v215 = vld [vmem:[%s199 + $0x38] sm:%s192]
                %216 = vst [vmem:[%s200 + $0x1c] sm:%s192] %v215
              $region37: #{linear_block.1} parent=31 // loop_footer
                %s198 = sadd.s32 1, %s194
              $region38: #{linear_block.1} parent=31 // loop_footer_branch
                %193 = sbr.rel target = $region34
              $region39: #{linear_block.1} parent=31 // loop_exit
                _
            $region32: #{linear_block.1} parent=23 // pred_fallthru
              _
          $region24: #{linear_block.1} parent=19 // pred_fallthru
            _
          %253 = vnop
        $region20: #{linear_block.1} parent=15 // pred_fallthru
          _
        // Predicated region
        $region58: #{linear_block.1} parent=15 // pred_check
          %p254 = pneg %p73
        $region59: #{linear_block.1} parent=15 // pred_check_branch
          %256 = sbr.rel (%p254) target = $region61
        $region60: #{linear_block.1} parent=15 // pred_region
          %s257 = sand.u32 %s63, 1
          %s258 = sand.u32 %s63, 1
          %s259 = smul.addr %s258, 64
          %s260 = scalar_lea.vmem [#allocation4], %s259
          %s261 = smul.u32 16, %s21
          %s262 = smul.addr %s261, 2
          %s263 = sadd.s32 %s20, %s262
          %s264 = smul.addr %s263, 4
          %s265 = scalar_lea.vmem %s1, %s264
          // Predicated region
          $region62: #{linear_block.1} parent=60 // pred_check
            _
          $region63: #{linear_block.1} parent=60 // pred_check_branch
            %267 = sbr.rel (0) target = $region65
          $region64: #{linear_block.1} parent=60 // pred_region
            // Predicated region
            $region66: #{linear_block.1} parent=64 // pred_check
              _
            $region67: #{linear_block.1} parent=64 // pred_check_branch
              %269 = sbr.rel target = $region69
            $region68: #{linear_block.1} parent=64 // pred_region
              // Predicated region
              $region81: #{linear_block.1} parent=68 // pred_check
                _
              $region82: #{linear_block.1} parent=68 // pred_check_branch
                %315 = sbr.rel (0) target = $region84
              $region83: #{linear_block.1} parent=68 // pred_region
                loop: start=0, step=1, limit=1
                $region85: #{linear_block.1} parent=83 // loop_pre_header
                  _
                $region86: #{linear_block.1} parent=83 // loop_header
                  %s317 = sphi 0, %s321
                  %p318 = scmp.ge.s32.totalorder %s317, 1
                  %s322 = sphi %s265, %s265
                  %s323 = sphi %s260, %s260
                $region87: #{linear_block.1} parent=83 // loop_header_branch
                  %320 = sbr.rel (%p318) target = $region91
                $region88: #{linear_block.1} parent=83 // loop_body
                  _
                $region89: #{linear_block.1} parent=83 // loop_footer
                  %s321 = sadd.s32 1, %s317
                $region90: #{linear_block.1} parent=83 // loop_footer_branch
                  %316 = sbr.rel target = $region86
                $region91: #{linear_block.1} parent=83 // loop_exit
                  _
                %s325 = ssub.s32 16, 1
                loop: start=0, step=1, limit=1
                $region92: #{linear_block.1} parent=83 // loop_pre_header
                  _
                $region93: #{linear_block.1} parent=83 // loop_header
                  %s327 = sphi 0, %s331
                  %p328 = scmp.ge.s32.totalorder %s327, 1
                  %s332 = sphi %s265, %s265
                  %s333 = sphi %s260, %s260
                $region94: #{linear_block.1} parent=83 // loop_header_branch
                  %330 = sbr.rel (%p328) target = $region98
                $region95: #{linear_block.1} parent=83 // loop_body
                  %v334 = vld [vmem:[%s332] sm:%s325]
                  %335 = vst [vmem:[%s333] sm:%s325] %v334
                  %v336 = vld [vmem:[%s332 + $0x8] sm:%s325]
                  %337 = vst [vmem:[%s333 + $0x4] sm:%s325] %v336
                  %v338 = vld [vmem:[%s332 + $0x10] sm:%s325]
                  %339 = vst [vmem:[%s333 + $0x8] sm:%s325] %v338
                  %v340 = vld [vmem:[%s332 + $0x18] sm:%s325]
                  %341 = vst [vmem:[%s333 + $0xc] sm:%s325] %v340
                  %v342 = vld [vmem:[%s332 + $0x20] sm:%s325]
                  %343 = vst [vmem:[%s333 + $0x10] sm:%s325] %v342
                  %v344 = vld [vmem:[%s332 + $0x28] sm:%s325]
                  %345 = vst [vmem:[%s333 + $0x14] sm:%s325] %v344
                  %v346 = vld [vmem:[%s332 + $0x30] sm:%s325]
                  %347 = vst [vmem:[%s333 + $0x18] sm:%s325] %v346
                  %v348 = vld [vmem:[%s332 + $0x38] sm:%s325]
                  %349 = vst [vmem:[%s333 + $0x1c] sm:%s325] %v348
                  %v350 = vld [vmem:[%s332 + $0x40] sm:%s325]
                  %351 = vst [vmem:[%s333 + $0x20] sm:%s325] %v350
                  %v352 = vld [vmem:[%s332 + $0x48] sm:%s325]
                  %353 = vst [vmem:[%s333 + $0x24] sm:%s325] %v352
                  %v354 = vld [vmem:[%s332 + $0x50] sm:%s325]
                  %355 = vst [vmem:[%s333 + $0x28] sm:%s325] %v354
                  %v356 = vld [vmem:[%s332 + $0x58] sm:%s325]
                  %357 = vst [vmem:[%s333 + $0x2c] sm:%s325] %v356
                  %v358 = vld [vmem:[%s332 + $0x60] sm:%s325]
                  %359 = vst [vmem:[%s333 + $0x30] sm:%s325] %v358
                  %v360 = vld [vmem:[%s332 + $0x68] sm:%s325]
                  %361 = vst [vmem:[%s333 + $0x34] sm:%s325] %v360
                  %v362 = vld [vmem:[%s332 + $0x70] sm:%s325]
                  %363 = vst [vmem:[%s333 + $0x38] sm:%s325] %v362
                  %v364 = vld [vmem:[%s332 + $0x78] sm:%s325]
                  %365 = vst [vmem:[%s333 + $0x3c] sm:%s325] %v364
                $region96: #{linear_block.1} parent=83 // loop_footer
                  %s331 = sadd.s32 1, %s327
                $region97: #{linear_block.1} parent=83 // loop_footer_branch
                  %326 = sbr.rel target = $region93
                $region98: #{linear_block.1} parent=83 // loop_exit
                  _
              $region84: #{linear_block.1} parent=68 // pred_fallthru
                _
            $region69: #{linear_block.1} parent=64 // pred_fallthru
              _
            // Predicated region
            $region70: #{linear_block.1} parent=64 // pred_check
              _
            $region71: #{linear_block.1} parent=64 // pred_check_branch
              %271 = sbr.rel (0) target = $region73
            $region72: #{linear_block.1} parent=64 // pred_region
              %s273 = ssub.s32 16, 1
              loop: start=0, step=1, limit=1
              $region74: #{linear_block.1} parent=72 // loop_pre_header
                _
              $region75: #{linear_block.1} parent=72 // loop_header
                %s275 = sphi 0, %s279
                %p276 = scmp.ge.s32.totalorder %s275, 1
                %s280 = sphi %s265, %s265
                %s281 = sphi %s260, %s260
              $region76: #{linear_block.1} parent=72 // loop_header_branch
                %278 = sbr.rel (%p276) target = $region80
              $region77: #{linear_block.1} parent=72 // loop_body
                %v282 = vld [vmem:[%s280] sm:%s273]
                %283 = vst [vmem:[%s281] sm:%s273] %v282
                %v284 = vld [vmem:[%s280 + $0x8] sm:%s273]
                %285 = vst [vmem:[%s281 + $0x4] sm:%s273] %v284
                %v286 = vld [vmem:[%s280 + $0x10] sm:%s273]
                %287 = vst [vmem:[%s281 + $0x8] sm:%s273] %v286
                %v288 = vld [vmem:[%s280 + $0x18] sm:%s273]
                %289 = vst [vmem:[%s281 + $0xc] sm:%s273] %v288
                %v290 = vld [vmem:[%s280 + $0x20] sm:%s273]
                %291 = vst [vmem:[%s281 + $0x10] sm:%s273] %v290
                %v292 = vld [vmem:[%s280 + $0x28] sm:%s273]
                %293 = vst [vmem:[%s281 + $0x14] sm:%s273] %v292
                %v294 = vld [vmem:[%s280 + $0x30] sm:%s273]
                %295 = vst [vmem:[%s281 + $0x18] sm:%s273] %v294
                %v296 = vld [vmem:[%s280 + $0x38] sm:%s273]
                %297 = vst [vmem:[%s281 + $0x1c] sm:%s273] %v296
                %v298 = vld [vmem:[%s280 + $0x40] sm:%s273]
                %299 = vst [vmem:[%s281 + $0x20] sm:%s273] %v298
                %v300 = vld [vmem:[%s280 + $0x48] sm:%s273]
                %301 = vst [vmem:[%s281 + $0x24] sm:%s273] %v300
                %v302 = vld [vmem:[%s280 + $0x50] sm:%s273]
                %303 = vst [vmem:[%s281 + $0x28] sm:%s273] %v302
                %v304 = vld [vmem:[%s280 + $0x58] sm:%s273]
                %305 = vst [vmem:[%s281 + $0x2c] sm:%s273] %v304
                %v306 = vld [vmem:[%s280 + $0x60] sm:%s273]
                %307 = vst [vmem:[%s281 + $0x30] sm:%s273] %v306
                %v308 = vld [vmem:[%s280 + $0x68] sm:%s273]
                %309 = vst [vmem:[%s281 + $0x34] sm:%s273] %v308
                %v310 = vld [vmem:[%s280 + $0x70] sm:%s273]
                %311 = vst [vmem:[%s281 + $0x38] sm:%s273] %v310
                %v312 = vld [vmem:[%s280 + $0x78] sm:%s273]
                %313 = vst [vmem:[%s281 + $0x3c] sm:%s273] %v312
              $region78: #{linear_block.1} parent=72 // loop_footer
                %s279 = sadd.s32 1, %s275
              $region79: #{linear_block.1} parent=72 // loop_footer_branch
                %274 = sbr.rel target = $region75
              $region80: #{linear_block.1} parent=72 // loop_exit
                _
            $region73: #{linear_block.1} parent=64 // pred_fallthru
              _
          $region65: #{linear_block.1} parent=60 // pred_fallthru
            _
          %366 = vnop
        $region61: #{linear_block.1} parent=15 // pred_fallthru
          _
        // Predicated region
        $region99: #{linear_block.1} parent=15 // pred_check
          %p367 = pneg %p99
        $region100: #{linear_block.1} parent=15 // pred_check_branch
          %369 = sbr.rel (%p367) target = $region102
        $region101: #{linear_block.1} parent=15 // pred_region
          %p370 = scmp.lt.s32.totalorder %s20, 1
          %s371 = scalar_select %p370, %s20, 1
          %s372 = scalar_lea.vmem %s2, %s371
        $region102: #{linear_block.1} parent=15 // pred_fallthru
          _
        // Predicated region
        $region103: #{linear_block.1} parent=15 // pred_check
          %p373 = pneg %p125
        $region104: #{linear_block.1} parent=15 // pred_check_branch
          %375 = sbr.rel (%p373) target = $region106
        $region105: #{linear_block.1} parent=15 // pred_region
          %p376 = scmp.lt.s32.totalorder %s20, 1
          %s377 = scalar_select %p376, %s20, 1
          %s378 = scalar_lea.vmem %s3, %s377
        $region106: #{linear_block.1} parent=15 // pred_fallthru
          _
      $region16: #{linear_block.1} parent=5 // pred_fallthru
        _
      %p379 = scmp.le.s32.totalorder 1, %s13
      %p380 = scmp.lt.s32.totalorder %s13, 5
      %p381 = pnand %p379, %p380
      %p382 = pneg %p381
      // Predicated region
      $region107: #{linear_block.1} parent=5 // pred_check
        _
      $region108: #{linear_block.1} parent=5 // pred_check_branch
        %384 = sbr.rel (%p381) target = $region110
      $region109: #{linear_block.1} parent=5 // pred_region
        %s385 = ssub.s32 %s13, 1
        %s386 = sand.u32 %s38, 1
        %s387 = sand.u32 %s38, 1
        %s388 = smul.addr %s387, 32
        %s389 = scalar_lea.vmem [#allocation3], %s388
        // Predicated region
        $region111: #{linear_block.1} parent=109 // pred_check
          %p390 = pneg %p51
        $region112: #{linear_block.1} parent=109 // pred_check_branch
          %392 = sbr.rel (%p390) target = $region114
        $region113: #{linear_block.1} parent=109 // pred_region
          _
        $region114: #{linear_block.1} parent=109 // pred_fallthru
          _
        %s393 = sand.u32 %s66, 1
        %s394 = sand.u32 %s66, 1
        %s395 = smul.addr %s394, 64
        %s396 = scalar_lea.vmem [#allocation4], %s395
        // Predicated region
        $region115: #{linear_block.1} parent=109 // pred_check
          %p397 = pneg %p79
        $region116: #{linear_block.1} parent=109 // pred_check_branch
          %399 = sbr.rel (%p397) target = $region118
        $region117: #{linear_block.1} parent=109 // pred_region
          _
        $region118: #{linear_block.1} parent=109 // pred_fallthru
          _
        %s400 = sand.u32 %s38, 1
        %s401 = sand.u32 %s38, 1
        %s402 = smul.addr %s401, 32
        %s403 = scalar_lea.vmem [#allocation3], %s402
        %p404 = pneg %p51
        %p405 = pneg %p48
        %s406 = sand.u32 %s66, 1
        %s407 = sand.u32 %s66, 1
        %s408 = smul.addr %s407, 64
        %s409 = scalar_lea.vmem [#allocation4], %s408
        %p410 = pneg %p79
        %p411 = pneg %p76
        %p412 = scmp.lt.s32.totalorder %s22, 1
        %s413 = scalar_select %p412, %s22, 1
        %s414 = scalar_lea.vmem %s2, %s413
        %p415 = pneg %p105
        %p416 = pneg %p102
        %p417 = scmp.lt.s32.totalorder %s22, 1
        %s418 = scalar_select %p417, %s22, 1
        %s419 = scalar_lea.vmem %s3, %s418
        %p420 = pneg %p131
        %p421 = pneg %p128
        %p422 = pneg %p157
        %p423 = pneg %p154
        %s424 = sand.u32 %s144, 1
        %s425 = scalar_lea.sflag [#allocation6], %s424
        %s426 = sand.u32 %s144, 1
        %s427 = smul.addr %s426, 64
        %s428 = scalar_lea.vmem [#allocation5], %s427
        %s429 = smul.u32 16, %s23
        %p430 = scmp.lt.s32.totalorder %s22, 1
        %s431 = scalar_select %p430, %s22, 1
        %s432 = scalar_lea.vmem %s2, %s431
        %p433 = scmp.lt.s32.totalorder %s22, 1
        %s434 = scalar_select %p433, %s22, 1
        %s435 = scalar_lea.vmem %s3, %s434
        %p436 = scmp.eq.s32.totalorder %s23, 0
        // Predicated region
        $region119: #{linear_block.1} parent=109 // pred_check
          %p437 = pneg %p436
        $region120: #{linear_block.1} parent=109 // pred_check_branch
          %439 = sbr.rel (%p437) target = $region122
        $region121: #{linear_block.1} parent=109 // pred_region
          %440 = vst [vmem:[#allocation2] sm:$0xff] 0.0
          %441 = vst [vmem:[#allocation2 + $0x8] sm:$0xff] 0.0
          %442 = vst [vmem:[#allocation2 + $0x10] sm:$0xff] 0.0
          %443 = vst [vmem:[#allocation2 + $0x18] sm:$0xff] 0.0
          %444 = vst [vmem:[#allocation2 + $0x20] sm:$0xff] 0.0
          %445 = vst [vmem:[#allocation2 + $0x28] sm:$0xff] 0.0
          %446 = vst [vmem:[#allocation2 + $0x30] sm:$0xff] 0.0
          %447 = vst [vmem:[#allocation2 + $0x38] sm:$0xff] 0.0
        $region122: #{linear_block.1} parent=109 // pred_fallthru
          _
        %v448 = vld [vmem:[#allocation2] sm:$0xff]
        %v449 = vld [vmem:[#allocation2 + $0x8] sm:$0xff]
        %v450 = vld [vmem:[#allocation2 + $0x10] sm:$0xff]
        %v451 = vld [vmem:[#allocation2 + $0x18] sm:$0xff]
        %v452 = vld [vmem:[#allocation2 + $0x20] sm:$0xff]
        %v453 = vld [vmem:[#allocation2 + $0x28] sm:$0xff]
        %v454 = vld [vmem:[#allocation2 + $0x30] sm:$0xff]
        %v455 = vld [vmem:[#allocation2 + $0x38] sm:$0xff]
        %v456 = vld [vmem:[%s389] sm:$0xf]
        %v457 = vld [vmem:[%s389 + $0x4] sm:$0xf]
        %v458 = vld [vmem:[%s389 + $0x8] sm:$0xf]
        %v459 = vld [vmem:[%s389 + $0xc] sm:$0xf]
        %v460 = vld [vmem:[%s389 + $0x10] sm:$0xf]
        %v461 = vld [vmem:[%s389 + $0x14] sm:$0xf]
        %v462 = vld [vmem:[%s389 + $0x18] sm:$0xf]
        %v463 = vld [vmem:[%s389 + $0x1c] sm:$0xf]
        %v464 = vld [vmem:[%s396] sm:$0xf]
        %v465 = vld [vmem:[%s396 + $0x4] sm:$0xf]
        %v466 = vld [vmem:[%s396 + $0x8] sm:$0xf]
        %v467 = vld [vmem:[%s396 + $0xc] sm:$0xf]
        %v468 = vld [vmem:[%s396 + $0x10] sm:$0xf]
        %v469 = vld [vmem:[%s396 + $0x14] sm:$0xf]
        %v470 = vld [vmem:[%s396 + $0x18] sm:$0xf]
        %v471 = vld [vmem:[%s396 + $0x1c] sm:$0xf]
        %v472 = vld [vmem:[%s396 + $0x20] sm:$0xf]
        %v473 = vld [vmem:[%s396 + $0x24] sm:$0xf]
        %v474 = vld [vmem:[%s396 + $0x28] sm:$0xf]
        %v475 = vld [vmem:[%s396 + $0x2c] sm:$0xf]
        %v476 = vld [vmem:[%s396 + $0x30] sm:$0xf]
        %v477 = vld [vmem:[%s396 + $0x34] sm:$0xf]
        %v478 = vld [vmem:[%s396 + $0x38] sm:$0xf]
        %v479 = vld [vmem:[%s396 + $0x3c] sm:$0xf]
        %v488 = vunpack.c.l.b16 %v456
        %v489 = vunpack.c.l.b16 %v457
        %v490 = vunpack.c.l.b16 %v458
        %v491 = vunpack.c.l.b16 %v459
        %v492 = vunpack.c.l.b16 %v460
        %v493 = vunpack.c.l.b16 %v461
        %v494 = vunpack.c.l.b16 %v462
        %v495 = vunpack.c.l.b16 %v463
        %v496 = vpack.c.b16 %v489, %v488
        %v497 = vpack.c.b16 %v491, %v490
        %v498 = vpack.c.b16 %v493, %v492
        %v499 = vpack.c.b16 %v495, %v494
        %v520 = vunpack.c.l.b16 %v464
        %v521 = vunpack.c.l.b16 %v465
        %v522 = vunpack.c.l.b16 %v466
        %v523 = vunpack.c.l.b16 %v467
        %v524 = vunpack.c.l.b16 %v468
        %v525 = vunpack.c.l.b16 %v469
        %v526 = vunpack.c.l.b16 %v470
        %v527 = vunpack.c.l.b16 %v471
        %v528 = vunpack.c.l.b16 %v472
        %v529 = vunpack.c.l.b16 %v473
        %v530 = vunpack.c.l.b16 %v474
        %v531 = vunpack.c.l.b16 %v475
        %v532 = vunpack.c.l.b16 %v476
        %v533 = vunpack.c.l.b16 %v477
        %v534 = vunpack.c.l.b16 %v478
        %v535 = vunpack.c.l.b16 %v479
        %v536 = vpack.c.b16 %v521, %v520
        %v537 = vpack.c.b16 %v523, %v522
        %v538 = vpack.c.b16 %v525, %v524
        %v539 = vpack.c.b16 %v527, %v526
        %v540 = vpack.c.b16 %v529, %v528
        %v541 = vpack.c.b16 %v531, %v530
        %v542 = vpack.c.b16 %v533, %v532
        %v543 = vpack.c.b16 %v535, %v534
        %552 = vmatpush.bf16.msra.mxu0 %v543
        %553 = vmatpush.bf16.msra.mxu0 %v542
        %554 = vmatpush.bf16.msra.mxu0 %v541
        %555 = vmatpush.bf16.msra.mxu0 %v540
        %556 = vmatpush.bf16.msra.mxu0 %v539
        %557 = vmatpush.bf16.msra.mxu0 %v538
        %558 = vmatpush.bf16.msra.mxu0 %v537
        %559 = vmatpush.bf16.msra.mxu0 %v536
        %560 = vmatmul.bf16.gmra.mxu0 %v496
        %v561 = vpop.f32.mrf.mxu0
        %v562 = vadd.f32 0.0, %v561
        %v563 = vpop.f32.mrf.mxu0
        %v564 = vadd.f32 0.0, %v563
        %565 = vmatmul.bf16.gmra.mxu0 %v497
        %v566 = vpop.f32.mrf.mxu0
        %v567 = vadd.f32 0.0, %v566
        %v568 = vpop.f32.mrf.mxu0
        %v569 = vadd.f32 0.0, %v568
        %570 = vmatmul.bf16.gmra.mxu0 %v498
        %v571 = vpop.f32.mrf.mxu0
        %v572 = vadd.f32 0.0, %v571
        %v573 = vpop.f32.mrf.mxu0
        %v574 = vadd.f32 0.0, %v573
        %575 = vmatmul.bf16.gmra.mxu0 %v499
        %v576 = vpop.f32.mrf.mxu0
        %v577 = vadd.f32 0.0, %v576
        %v578 = vpop.f32.mrf.mxu0
        %v579 = vadd.f32 0.0, %v578
        %580 = vdwg.mxu0
        %v581 = vadd.f32 %v448, %v562
        %v582 = vadd.f32 %v449, %v564
        %v583 = vadd.f32 %v450, %v567
        %v584 = vadd.f32 %v451, %v569
        %v585 = vadd.f32 %v452, %v572
        %v586 = vadd.f32 %v453, %v574
        %v587 = vadd.f32 %v454, %v577
        %v588 = vadd.f32 %v455, %v579
        %589 = vst [vmem:[#allocation2] sm:$0xff] %v581
        %590 = vst [vmem:[#allocation2 + $0x8] sm:$0xff] %v582
        %591 = vst [vmem:[#allocation2 + $0x10] sm:$0xff] %v583
        %592 = vst [vmem:[#allocation2 + $0x18] sm:$0xff] %v584
        %593 = vst [vmem:[#allocation2 + $0x20] sm:$0xff] %v585
        %594 = vst [vmem:[#allocation2 + $0x28] sm:$0xff] %v586
        %595 = vst [vmem:[#allocation2 + $0x30] sm:$0xff] %v587
        %596 = vst [vmem:[#allocation2 + $0x38] sm:$0xff] %v588
        %p597 = scmp.eq.s32.totalorder %s23, 1
        // Predicated region
        $region123: #{linear_block.1} parent=109 // pred_check
          %p598 = pneg %p597
        $region124: #{linear_block.1} parent=109 // pred_check_branch
          %600 = sbr.rel (%p598) target = $region126
        $region125: #{linear_block.1} parent=109 // pred_region
          %v601 = vld [vmem:[#allocation2] sm:$0xff]
          %v602 = vld [vmem:[#allocation2 + $0x8] sm:$0xff]
          %v603 = vld [vmem:[#allocation2 + $0x10] sm:$0xff]
          %v604 = vld [vmem:[#allocation2 + $0x18] sm:$0xff]
          %v605 = vld [vmem:[#allocation2 + $0x20] sm:$0xff]
          %v606 = vld [vmem:[#allocation2 + $0x28] sm:$0xff]
          %v607 = vld [vmem:[#allocation2 + $0x30] sm:$0xff]
          %v608 = vld [vmem:[#allocation2 + $0x38] sm:$0xff]
          %v609 = vadd.f32 %v601, %v602
          %v610 = vadd.f32 %v609, %v603
          %v611 = vadd.f32 %v610, %v604
          %v612 = vadd.f32 %v611, %v605
          %v613 = vadd.f32 %v612, %v606
          %v614 = vadd.f32 %v613, %v607
          %v615 = vadd.f32 %v614, %v608
          %v616 = vrot.slane %v615, 4
          %v617 = vadd.f32 %v615, %v616
          %v618 = vrot.slane %v617, 2
          %v619 = vadd.f32 %v617, %v618
          %v620 = vrot.slane %v619, 1
          %v621 = vadd.f32 %v619, %v620
          %v622 = vmul.f32 %v621, 0.015625
          %v623 = vsub.f32 %v601, %v622
          %v624 = vsub.f32 %v602, %v622
          %v625 = vsub.f32 %v603, %v622
          %v626 = vsub.f32 %v604, %v622
          %v627 = vsub.f32 %v605, %v622
          %v628 = vsub.f32 %v606, %v622
          %v629 = vsub.f32 %v607, %v622
          %v630 = vsub.f32 %v608, %v622
          %v631 = vmul.f32 %v623, %v623
          %v632 = vmul.f32 %v624, %v624
          %v633 = vmul.f32 %v625, %v625
          %v634 = vmul.f32 %v626, %v626
          %v635 = vmul.f32 %v627, %v627
          %v636 = vmul.f32 %v628, %v628
          %v637 = vmul.f32 %v629, %v629
          %v638 = vmul.f32 %v630, %v630
          %v639 = vadd.f32 %v631, %v632
          %v640 = vadd.f32 %v639, %v633
          %v641 = vadd.f32 %v640, %v634
          %v642 = vadd.f32 %v641, %v635
          %v643 = vadd.f32 %v642, %v636
          %v644 = vadd.f32 %v643, %v637
          %v645 = vadd.f32 %v644, %v638
          %v646 = vrot.slane %v645, 4
          %v647 = vadd.f32 %v645, %v646
          %v648 = vrot.slane %v647, 2
          %v649 = vadd.f32 %v647, %v648
          %v650 = vrot.slane %v649, 1
          %v651 = vadd.f32 %v649, %v650
          %v652 = vmul.f32 %v651, 0.015625
          %v653 = vld [vmem:[%s432] sm:$0x1]
          %v654 = vadd.f32 %v652, 1e-05
          %v655 = vrsqrt.pop %v654
          %v656 = vmul.f32 %v655, %v654
          %v657 = vmul.f32 %v656, %v655
          %v658 = vmul.f32 0.5, %v657
          %v659 = vsub.f32 1.5, %v658
          %v660 = vmul.f32 %v655, %v659
          %vm661 = vweird.f32 %v654
          %vm662 = vweird.f32 %v655
          %vm663 = vmor %vm661, %vm662
          %v664 = vsel %vm663, %v655, %v660
          %v665 = vmul.f32 %v653, %v664
          %v667 = vperm.slane %v665, 0
          %v669 = vmul.f32 %v623, %v667
          %v670 = vmul.f32 %v624, %v667
          %v671 = vmul.f32 %v625, %v667
          %v672 = vmul.f32 %v626, %v667
          %v673 = vmul.f32 %v627, %v667
          %v674 = vmul.f32 %v628, %v667
          %v675 = vmul.f32 %v629, %v667
          %v676 = vmul.f32 %v630, %v667
          %v677 = vld [vmem:[%s435] sm:$0x1]
          %v679 = vperm.slane %v677, 0
          %v681 = vadd.f32 %v669, %v679
          %v682 = vadd.f32 %v670, %v679
          %v683 = vadd.f32 %v671, %v679
          %v684 = vadd.f32 %v672, %v679
          %v685 = vadd.f32 %v673, %v679
          %v686 = vadd.f32 %v674, %v679
          %v687 = vadd.f32 %v675, %v679
          %v688 = vadd.f32 %v676, %v679
          %vm689 = vcmp.ge.f32.partialorder %v681, 0.0
          %vm690 = vcmp.ge.f32.partialorder %v682, 0.0
          %vm691 = vcmp.ge.f32.partialorder %v683, 0.0
          %vm692 = vcmp.ge.f32.partialorder %v684, 0.0
          %vm693 = vcmp.ge.f32.partialorder %v685, 0.0
          %vm694 = vcmp.ge.f32.partialorder %v686, 0.0
          %vm695 = vcmp.ge.f32.partialorder %v687, 0.0
          %vm696 = vcmp.ge.f32.partialorder %v688, 0.0
          %v697 = vmul.f32 %v681, 0.2
          %v698 = vmul.f32 %v682, 0.2
          %v699 = vmul.f32 %v683, 0.2
          %v700 = vmul.f32 %v684, 0.2
          %v701 = vmul.f32 %v685, 0.2
          %v702 = vmul.f32 %v686, 0.2
          %v703 = vmul.f32 %v687, 0.2
          %v704 = vmul.f32 %v688, 0.2
          %v705 = vsel %vm689, %v681, %v697
          %v706 = vsel %vm690, %v682, %v698
          %v707 = vsel %vm691, %v683, %v699
          %v708 = vsel %vm692, %v684, %v700
          %v709 = vsel %vm693, %v685, %v701
          %v710 = vsel %vm694, %v686, %v702
          %v711 = vsel %vm695, %v687, %v703
          %v712 = vsel %vm696, %v688, %v704
          %713 = vst [vmem:[%s428] sm:$0xff] %v705
          %714 = vst [vmem:[%s428 + $0x8] sm:$0xff] %v706
          %715 = vst [vmem:[%s428 + $0x10] sm:$0xff] %v707
          %716 = vst [vmem:[%s428 + $0x18] sm:$0xff] %v708
          %717 = vst [vmem:[%s428 + $0x20] sm:$0xff] %v709
          %718 = vst [vmem:[%s428 + $0x28] sm:$0xff] %v710
          %719 = vst [vmem:[%s428 + $0x30] sm:$0xff] %v711
          %720 = vst [vmem:[%s428 + $0x38] sm:$0xff] %v712
        $region126: #{linear_block.1} parent=109 // pred_fallthru
          _
        %s721 = sand.u32 %s144, 1
        %s722 = scalar_lea.sflag [#allocation6], %s721
        %s723 = sand.u32 %s144, 1
        %s724 = smul.addr %s723, 64
        %s725 = scalar_lea.vmem [#allocation5], %s724
        // Predicated region
        $region127: #{linear_block.1} parent=109 // pred_check
          %p726 = pneg %p154
        $region128: #{linear_block.1} parent=109 // pred_check_branch
          %728 = sbr.rel (%p726) target = $region130
        $region129: #{linear_block.1} parent=109 // pred_region
          %730 = vsyncadd %s722, 0
          %s731 = smul.addr %s22, 8
          %s732 = scalar_lea.hbm %s4, %s731
          %s733 = sshll.u32 %s725, 4
          %s734 = int_to_ptr.vmem [resolvable:$true] %s733
          %s735 = sshll.u32 %s732, 4
          %s736 = int_to_ptr.hbm [resolvable:$true] %s735
          %741 = dma.vmem_to_hbm [thread:$0]  %s734, 1024, %s736, %s722, 128, 256, 8
        $region130: #{linear_block.1} parent=109 // pred_fallthru
          _
      $region110: #{linear_block.1} parent=5 // pred_fallthru
        _
      %p742 = scmp.le.s32.totalorder 2, %s13
      // Predicated region
      $region131: #{linear_block.1} parent=5 // pred_check
        %p743 = pneg %p742
      $region132: #{linear_block.1} parent=5 // pred_check_branch
        %745 = sbr.rel (%p743) target = $region134
      $region133: #{linear_block.1} parent=5 // pred_region
        %s746 = ssub.s32 %s13, 2
        // Predicated region
        $region135: #{linear_block.1} parent=133 // pred_check
          %p747 = pneg %p160
        $region136: #{linear_block.1} parent=133 // pred_check_branch
          %749 = sbr.rel (%p747) target = $region138
        $region137: #{linear_block.1} parent=133 // pred_region
          %s750 = sand.u32 %s145, 1
          %s751 = scalar_lea.sflag [#allocation6], %s750
          %s752 = sand.u32 %s145, 1
          %s753 = smul.addr %s752, 64
          %s754 = scalar_lea.vmem [#allocation5], %s753
          %756 = dma.done %s751, 1024
        $region138: #{linear_block.1} parent=133 // pred_fallthru
          _
      $region134: #{linear_block.1} parent=5 // pred_fallthru
        _
    $region6: #{linear_block.1} parent=1 // loop_footer
      %s17 = sadd.s32 1, %s13
    $region7: #{linear_block.1} parent=1 // loop_footer_branch
      %12 = sbr.rel target = $region3
    $region8: #{linear_block.1} parent=1 // loop_exit
      _
    %757 = vsyncpa [#allocation6], 1
    %s758 = scalar_lea.sflag [#allocation6], 1
    %759 = vsyncpa %s758, 1

</llo_original>
